<compile_context>
chip_gen: v6e
topology: v6e:2x2x1
jax: 0.10.0
libtpu: 0.0.40
codegen_flags: <defaults>
</compile_context>

<pallas_src>
import functools

import jax
import jax.numpy as jnp
from jax.experimental import pallas as pl
from jax.experimental.pallas import tpu as pltpu


def _pinn_kernel(num_middle,
                 xs_ref, w_in_ref, b_in_ref,
                 w_mid_ref, b_mid_ref,
                 w_out_ref, b_out_ref,
                 out_ref):
    """Whole MLP forward for one lane-dense batch tile (fully VMEM resident)."""
    # Input layer: (D, 3) @ (3, TB) + (D, 1) -> (D, TB); batch stays on lanes.
    h = jnp.tanh(
        jnp.dot(w_in_ref[...], xs_ref[...], preferred_element_type=jnp.float32)
        + b_in_ref[...]
    )
    # Middle layers (static Python unroll -- num_middle is a compile-time int,
    # so when it is 0 the dummy stacked weights are never touched).
    for i in range(num_middle):
        h = jnp.tanh(
            jnp.dot(w_mid_ref[i], h, preferred_element_type=jnp.float32)
            + b_mid_ref[i]
        )
    # Output layer Linear(D -> 1): a single-output-column MXU pass would waste
    # the systolic array, so use a VPU multiply + sublane reduce (XLU) instead.
    logits = jnp.sum(h * w_out_ref[...], axis=0, keepdims=True) + b_out_ref[0]
    out_ref[...] = logits.astype(out_ref.dtype)


def pinn_forward(x, y, t, params, *, batch_tile=None):
    """Pallas implementation of PINN.forward(x, y, t).

    x, y, t: (N, 1) float32.  Returns logits of shape (N, 1) float32.
    Params use the PyTorch layout: W is (out_features, in_features).
    """
    w_in, b_in, w_mid, b_mid, w_out, b_out = params
    N = x.shape[0]
    D = w_in.shape[0]
    num_middle = w_mid.shape[0]

    # Wrapper glue: feature-major input, batch on the lane axis.  Shape (3, N).
    xs = jnp.concatenate([x, y, t], axis=1).astype(jnp.float32).T

    # Lane-dense batch tile (multiple of 128).  Large tiles amortize the
    # ~0.35us per-grid-step overhead; when N allows, keep >= 2 grid steps so
    # both TensorCores on v7x get work.
    if batch_tile is None:
        if N <= 2 * 128:
            batch_tile = 128
        else:
            half = -(-N // 2)                                   # ceil(N / 2)
            batch_tile = min(2048, ((half + 127) // 128) * 128)
    TB = batch_tile
    N_pad = ((N + TB - 1) // TB) * TB
    if N_pad != N:
        xs = jnp.pad(xs, ((0, 0), (0, N_pad - N)))

    # Biases as columns for (D, TB) broadcasting; W_out as a (D, 1) column for
    # the VPU reduce; b_out stays a (1,) scalar destined for SMEM.
    b_in_c = b_in.reshape(D, 1)
    w_out_c = w_out.reshape(D, 1)
    b_out_s = b_out.reshape(1)

    # Stacked middle layers.  When there are none, feed a (1, D, D) dummy that
    # the (statically unrolled, zero-trip) loop never reads.
    n_mid_buf = max(num_middle, 1)
    if num_middle == 0:
        w_mid_b = jnp.zeros((1, D, D), jnp.float32)
        b_mid_c = jnp.zeros((1, D, 1), jnp.float32)
    else:
        w_mid_b = w_mid
        b_mid_c = b_mid.reshape(num_middle, D, 1)

    grid = (N_pad // TB,)

    out = pl.pallas_call(
        functools.partial(_pinn_kernel, num_middle),
        out_shape=jax.ShapeDtypeStruct((1, N_pad), jnp.float32),
        grid_spec=pltpu.PrefetchScalarGridSpec(
            num_scalar_prefetch=0,
            grid=grid,
            in_specs=[
                pl.BlockSpec((3, TB), lambda i: (0, i)),               # xs tile (lane-dense)
                pl.BlockSpec((D, 3), lambda i: (0, 0)),                # W_in  (out, in)
                pl.BlockSpec((D, 1), lambda i: (0, 0)),                # b_in column
                pl.BlockSpec((n_mid_buf, D, D), lambda i: (0, 0, 0)),  # stacked middle W
                pl.BlockSpec((n_mid_buf, D, 1), lambda i: (0, 0, 0)),  # stacked middle b
                pl.BlockSpec((D, 1), lambda i: (0, 0)),                # W_out column
                pl.BlockSpec(memory_space=pltpu.MemorySpace.SMEM),     # b_out scalar
            ],
            out_specs=pl.BlockSpec((1, TB), lambda i: (0, i)),         # lane-dense output
        ),
        compiler_params=pltpu.CompilerParams(
            dimension_semantics=("parallel",),
        ),
    )(xs, w_in, b_in_c, w_mid_b, b_mid_c, w_out_c, b_out_s)

    return out[0, :N].reshape(N, 1)


def init_pinn_params(key, num_hidden, dim_hidden):
    """Deterministic parameter init matching the PyTorch module's layout.

    Weights are stored exactly as PyTorch does: (out_features, in_features).
    """
    assert num_hidden >= 1
    num_middle = num_hidden - 1
    keys = jax.random.split(key, 6)
    w_in = jax.random.normal(keys[0], (dim_hidden, 3), jnp.float32) * 0.5
    b_in = jax.random.normal(keys[1], (dim_hidden,), jnp.float32) * 0.1
    w_mid = jax.random.normal(
        keys[2], (num_middle, dim_hidden, dim_hidden), jnp.float32) * 0.3
    b_mid = jax.random.normal(keys[3], (num_middle, dim_hidden), jnp.float32) * 0.1
    w_out = jax.random.normal(keys[4], (1, dim_hidden), jnp.float32) * 0.5
    b_out = jax.random.normal(keys[5], (1,), jnp.float32) * 0.1
    return (w_in, b_in, w_mid, b_mid, w_out, b_out)


def pinn_forward_ref(x, y, t, params):
    """Pure-JAX reference (mirrors the PyTorch forward exactly: x @ W.T + b)."""
    w_in, b_in, w_mid, b_mid, w_out, b_out = params
    h = jnp.tanh(jnp.concatenate([x, y, t], axis=1) @ w_in.T + b_in)
    for i in range(w_mid.shape[0]):
        h = jnp.tanh(h @ w_mid[i].T + b_mid[i])
    return h @ w_out.T + b_out


if __name__ == "__main__":
    key = jax.random.PRNGKey(0)
    k_param, kx, ky, kt = jax.random.split(key, 4)

    num_hidden = 3     # -> 2 middle layers
    dim_hidden = 32

    params = init_pinn_params(k_param, num_hidden, dim_hidden)

    # Small single-tile case (N=8 collocation points).
    N = 8
    x = jax.random.normal(kx, (N, 1), jnp.float32)
    y = jax.random.normal(ky, (N, 1), jnp.float32)
    t = jax.random.normal(kt, (N, 1), jnp.float32)

    logits = jax.block_until_ready(pinn_forward(x, y, t, params))
    ref = pinn_forward_ref(x, y, t, params)
    assert logits.shape == (N, 1), logits.shape
    assert jnp.allclose(logits, ref, atol=1e-5, rtol=1e-5), (logits, ref)

    # Multi-tile / padded case to exercise the grid path.
    N2 = 300
    x2 = jax.random.normal(kx, (N2, 1), jnp.float32)
    y2 = jax.random.normal(ky, (N2, 1), jnp.float32)
    t2 = jax.random.normal(kt, (N2, 1), jnp.float32)

    logits2 = jax.block_until_ready(pinn_forward(x2, y2, t2, params))
    ref2 = pinn_forward_ref(x2, y2, t2, params)
    assert logits2.shape == (N2, 1), logits2.shape
    assert jnp.allclose(logits2, ref2, atol=1e-5, rtol=1e-5)

    print("KERNEL_OK")
</pallas_src>

<mosaic_0001>
module attributes {stable_mosaic.version = 11 : i64} {
  func.func @_pinn_kernel(%arg0: i32, %arg1: memref<3x128xf32, #tpu.memory_space<vmem>>, %arg2: memref<32x3xf32, #tpu.memory_space<vmem>>, %arg3: memref<32x1xf32, #tpu.memory_space<vmem>>, %arg4: memref<2x32x32xf32, #tpu.memory_space<vmem>>, %arg5: memref<2x32x1xf32, #tpu.memory_space<vmem>>, %arg6: memref<32x1xf32, #tpu.memory_space<vmem>>, %arg7: memref<1xf32, #tpu.memory_space<smem>>, %arg8: memref<1x128xf32, #tpu.memory_space<vmem>>) attributes {dimension_semantics = [#tpu.dimension_semantics<parallel>], iteration_bounds = array<i64: 1>, scalar_prefetch = 0 : i64, scratch_operands = 0 : i64, tpu.core_type = #tpu.core_type<tc>, window_params = [{transform_indices = @transform_0, window_bounds = array<i64: 3, 128>}, {pipeline_mode = #tpu.pipeline_mode<synchronous>, transform_indices = @transform_1, window_bounds = array<i64: 32, 3>}, {pipeline_mode = #tpu.pipeline_mode<synchronous>, transform_indices = @transform_2, window_bounds = array<i64: 32, 1>}, {pipeline_mode = #tpu.pipeline_mode<synchronous>, transform_indices = @transform_3, window_bounds = array<i64: 2, 32, 32>}, {pipeline_mode = #tpu.pipeline_mode<synchronous>, transform_indices = @transform_4, window_bounds = array<i64: 2, 32, 1>}, {pipeline_mode = #tpu.pipeline_mode<synchronous>, transform_indices = @transform_5, window_bounds = array<i64: 32, 1>}, {transform_indices = @transform_6, window_bounds = array<i64: 1>}, {transform_indices = @transform_7, window_bounds = array<i64: 1, 128>}]} {
    %c0 = arith.constant 0 : index
    %c0_0 = arith.constant 0 : index
    %0 = vector.load %arg2[%c0, %c0_0] : memref<32x3xf32, #tpu.memory_space<vmem>>, vector<32x3xf32>
    %c0_1 = arith.constant 0 : index
    %c0_2 = arith.constant 0 : index
    %1 = vector.load %arg1[%c0_1, %c0_2] : memref<3x128xf32, #tpu.memory_space<vmem>>, vector<3x128xf32>
    %cst = arith.constant dense<0.000000e+00> : vector<32x128xf32>
    %2 = tpu.matmul %0, %1, %cst {dimension_numbers = #tpu.dot_dimension_numbers<[1], [0], [0], [1], [0, 0, 1, 1], [], []>} : vector<32x3xf32>, vector<3x128xf32>, vector<32x128xf32> -> vector<32x128xf32>
    %c0_3 = arith.constant 0 : index
    %c0_4 = arith.constant 0 : index
    %3 = vector.load %arg3[%c0_3, %c0_4] : memref<32x1xf32, #tpu.memory_space<vmem>>, vector<32x1xf32>
    %4 = vector.broadcast %3 : vector<32x1xf32> to vector<32x128xf32>
    %5 = arith.addf %2, %4 : vector<32x128xf32>
    %6 = math.tanh %5 : vector<32x128xf32>
    %c0_5 = arith.constant 0 : index
    %c0_6 = arith.constant 0 : index
    %c0_7 = arith.constant 0 : index
    %7 = vector.load %arg4[%c0_5, %c0_6, %c0_7] : memref<2x32x32xf32, #tpu.memory_space<vmem>>, vector<1x32x32xf32>
    %8 = vector.shape_cast %7 : vector<1x32x32xf32> to vector<32x32xf32>
    %cst_8 = arith.constant dense<0.000000e+00> : vector<32x128xf32>
    %9 = tpu.matmul %8, %6, %cst_8 {dimension_numbers = #tpu.dot_dimension_numbers<[1], [0], [0], [1], [0, 0, 1, 1], [], []>} : vector<32x32xf32>, vector<32x128xf32>, vector<32x128xf32> -> vector<32x128xf32>
    %c0_9 = arith.constant 0 : index
    %c0_10 = arith.constant 0 : index
    %c0_11 = arith.constant 0 : index
    %10 = vector.load %arg5[%c0_9, %c0_10, %c0_11] : memref<2x32x1xf32, #tpu.memory_space<vmem>>, vector<1x32x1xf32>
    %11 = vector.shape_cast %10 : vector<1x32x1xf32> to vector<32x1xf32>
    %12 = vector.broadcast %11 : vector<32x1xf32> to vector<32x128xf32>
    %13 = arith.addf %9, %12 : vector<32x128xf32>
    %14 = math.tanh %13 : vector<32x128xf32>
    %c1 = arith.constant 1 : index
    %c0_12 = arith.constant 0 : index
    %c0_13 = arith.constant 0 : index
    %15 = vector.load %arg4[%c1, %c0_12, %c0_13] : memref<2x32x32xf32, #tpu.memory_space<vmem>>, vector<1x32x32xf32>
    %16 = vector.shape_cast %15 : vector<1x32x32xf32> to vector<32x32xf32>
    %cst_14 = arith.constant dense<0.000000e+00> : vector<32x128xf32>
    %17 = tpu.matmul %16, %14, %cst_14 {dimension_numbers = #tpu.dot_dimension_numbers<[1], [0], [0], [1], [0, 0, 1, 1], [], []>} : vector<32x32xf32>, vector<32x128xf32>, vector<32x128xf32> -> vector<32x128xf32>
    %c1_15 = arith.constant 1 : index
    %c0_16 = arith.constant 0 : index
    %c0_17 = arith.constant 0 : index
    %18 = vector.load %arg5[%c1_15, %c0_16, %c0_17] : memref<2x32x1xf32, #tpu.memory_space<vmem>>, vector<1x32x1xf32>
    %19 = vector.shape_cast %18 : vector<1x32x1xf32> to vector<32x1xf32>
    %20 = vector.broadcast %19 : vector<32x1xf32> to vector<32x128xf32>
    %21 = arith.addf %17, %20 : vector<32x128xf32>
    %22 = math.tanh %21 : vector<32x128xf32>
    %c0_18 = arith.constant 0 : index
    %c0_19 = arith.constant 0 : index
    %23 = vector.load %arg6[%c0_18, %c0_19] : memref<32x1xf32, #tpu.memory_space<vmem>>, vector<32x1xf32>
    %24 = vector.broadcast %23 : vector<32x1xf32> to vector<32x128xf32>
    %25 = arith.mulf %22, %24 : vector<32x128xf32>
    %cst_20 = arith.constant dense<0.000000e+00> : vector<128xf32>
    %26 = vector.multi_reduction <add>, %25, %cst_20 [0] : vector<32x128xf32> to vector<128xf32>
    %27 = vector.shape_cast %26 : vector<128xf32> to vector<1x128xf32>
    %c0_21 = arith.constant 0 : index
    %28 = memref.load %arg7[%c0_21] : memref<1xf32, #tpu.memory_space<smem>>
    %29 = vector.broadcast %28 : f32 to vector<1x128xf32>
    %30 = arith.addf %27, %29 : vector<1x128xf32>
    %c0_22 = arith.constant 0 : index
    %c0_23 = arith.constant 0 : index
    %31 = vector.load %arg8[%c0_22, %c0_23] : memref<1x128xf32, #tpu.memory_space<vmem>>, vector<1x128xf32>
    tpu.vector_store %arg8[%c0_22, %c0_23], %30 {strides = array<i32>} : memref<1x128xf32, #tpu.memory_space<vmem>>, vector<1x128xf32>,
    return
  }
  func.func @transform_0(%arg0: i32) -> (i32, i32) {
    %c0_i32 = arith.constant 0 : i32
    %c0_i32_0 = arith.constant 0 : i32
    return %c0_i32, %arg0 : i32, i32
  }
  func.func @transform_1(%arg0: i32) -> (i32, i32) {
    %c0_i32 = arith.constant 0 : i32
    %c0_i32_0 = arith.constant 0 : i32
    %c0_i32_1 = arith.constant 0 : i32
    return %c0_i32, %c0_i32_0 : i32, i32
  }
  func.func @transform_2(%arg0: i32) -> (i32, i32) {
    %c0_i32 = arith.constant 0 : i32
    %c0_i32_0 = arith.constant 0 : i32
    %c0_i32_1 = arith.constant 0 : i32
    return %c0_i32, %c0_i32_0 : i32, i32
  }
  func.func @transform_3(%arg0: i32) -> (i32, i32, i32) {
    %c0_i32 = arith.constant 0 : i32
    %c0_i32_0 = arith.constant 0 : i32
    %c0_i32_1 = arith.constant 0 : i32
    %c0_i32_2 = arith.constant 0 : i32
    return %c0_i32, %c0_i32_0, %c0_i32_1 : i32, i32, i32
  }
  func.func @transform_4(%arg0: i32) -> (i32, i32, i32) {
    %c0_i32 = arith.constant 0 : i32
    %c0_i32_0 = arith.constant 0 : i32
    %c0_i32_1 = arith.constant 0 : i32
    %c0_i32_2 = arith.constant 0 : i32
    return %c0_i32, %c0_i32_0, %c0_i32_1 : i32, i32, i32
  }
  func.func @transform_5(%arg0: i32) -> (i32, i32) {
    %c0_i32 = arith.constant 0 : i32
    %c0_i32_0 = arith.constant 0 : i32
    %c0_i32_1 = arith.constant 0 : i32
    return %c0_i32, %c0_i32_0 : i32, i32
  }
  func.func @transform_6(%arg0: i32) -> i32 {
    %c0_i32 = arith.constant 0 : i32
    %c0_i32_0 = arith.constant 0 : i32
    return %c0_i32 : i32
  }
  func.func @transform_7(%arg0: i32) -> (i32, i32) {
    %c0_i32 = arith.constant 0 : i32
    %c0_i32_0 = arith.constant 0 : i32
    return %c0_i32, %arg0 : i32, i32
  }
}

</mosaic_0001>

<llo_original>
// kernel: tpu_custom_call.1
$region0: #{tpu_custom_call.1}
  #allocation0 [shape = 'u32[]', space=smem, size = 0x4, offset = 0x4, fixed_abs, tag = 'smem constant byte address 0x4 - core index']
  #allocation1 [shape = 'u32[144,128]{1,0:T(1,128)}', space=vmem, size = 0x12000, scoped, tag = 'internal scratch']
  #allocation2 [shape = 'f32[1]{0:T(128)S(6)}', space=smem, size = 0x200, scoped, tag = 'scoped memory for tpu_custom_call.1']
  %s0 = inlined_call_operand.vmem [shape: f32[3,128], index: 0, kind: input, shape index: {}]
  %s1 = inlined_call_operand.vmem [shape: f32[32,3], index: 1, kind: input, shape index: {}]
  %s2 = inlined_call_operand.vmem [shape: f32[32,1], index: 2, kind: input, shape index: {}]
  %s3 = inlined_call_operand.vmem [shape: f32[2,32,32], index: 3, kind: input, shape index: {}]
  %s4 = inlined_call_operand.vmem [shape: f32[2,32,1], index: 4, kind: input, shape index: {}]
  %s5 = inlined_call_operand.vmem [shape: f32[32,1], index: 5, kind: input, shape index: {}]
  %s6 = inlined_call_operand.<no memory space> [shape: f32[1], index: 6, kind: input, shape index: {}]
  %s7 = inlined_call_operand.hbm [shape: f32[1,128], index: 7, kind: output, shape index: {}]
  %s8 = sld [smem:[#allocation0]]
  $region38: #{tpu_custom_call.1} parent=0
    _
  %s10 = ssub.s32 1, %s8
  %s11 = scalar_select 0, %s10, %s8
  %12 = sst [smem:[#allocation2]] %s6
  $region1: #{tpu_custom_call.1} parent=0
    #allocation3 [shape = 'u8[512]{0}', space=vmem, size = 0x400, scoped, tag = 'output window, operand 0, single buffered']
    #allocation4 [shape = 's32[1]{0}', space=sflag, size = 0x4, scoped, tag = 'scoped memory for tpu_custom_call.1']
    %13 = vsyncpa [#allocation4], 0
    // Predicated region
    $region2: #{tpu_custom_call.1} parent=1 // pred_check
      _
    $region3: #{tpu_custom_call.1} parent=1 // pred_check_branch
      %15 = sbr.rel (0) target = $region5
    $region4: #{tpu_custom_call.1} parent=1 // pred_region
      _
    $region5: #{tpu_custom_call.1} parent=1 // pred_fallthru
      _
    // Predicated region
    $region6: #{tpu_custom_call.1} parent=1 // pred_check
      _
    $region7: #{tpu_custom_call.1} parent=1 // pred_check_branch
      %17 = sbr.rel (0) target = $region9
    $region8: #{tpu_custom_call.1} parent=1 // pred_region
      _
    $region9: #{tpu_custom_call.1} parent=1 // pred_fallthru
      _
    // Predicated region
    $region10: #{tpu_custom_call.1} parent=1 // pred_check
      _
    $region11: #{tpu_custom_call.1} parent=1 // pred_check_branch
      %19 = sbr.rel (0) target = $region13
    $region12: #{tpu_custom_call.1} parent=1 // pred_region
      _
    $region13: #{tpu_custom_call.1} parent=1 // pred_fallthru
      _
    // Predicated region
    $region14: #{tpu_custom_call.1} parent=1 // pred_check
      _
    $region15: #{tpu_custom_call.1} parent=1 // pred_check_branch
      %21 = sbr.rel (0) target = $region17
    $region16: #{tpu_custom_call.1} parent=1 // pred_region
      _
    $region17: #{tpu_custom_call.1} parent=1 // pred_fallthru
      _
    // Predicated region
    $region18: #{tpu_custom_call.1} parent=1 // pred_check
      _
    $region19: #{tpu_custom_call.1} parent=1 // pred_check_branch
      %23 = sbr.rel (0) target = $region21
    $region20: #{tpu_custom_call.1} parent=1 // pred_region
      _
    $region21: #{tpu_custom_call.1} parent=1 // pred_fallthru
      _
    // Predicated region
    $region22: #{tpu_custom_call.1} parent=1 // pred_check
      _
    $region23: #{tpu_custom_call.1} parent=1 // pred_check_branch
      %25 = sbr.rel (0) target = $region25
    $region24: #{tpu_custom_call.1} parent=1 // pred_region
      _
    $region25: #{tpu_custom_call.1} parent=1 // pred_fallthru
      _
    // Predicated region
    $region26: #{tpu_custom_call.1} parent=1 // pred_check
      _
    $region27: #{tpu_custom_call.1} parent=1 // pred_check_branch
      %27 = sbr.rel (0) target = $region29
    $region28: #{tpu_custom_call.1} parent=1 // pred_region
      _
    $region29: #{tpu_custom_call.1} parent=1 // pred_fallthru
      _
    %v28 = vld [vmem:[%s1] sm:$0xff]
    %v29 = vld [vmem:[%s1 + $0x8] sm:$0xff]
    %v30 = vld [vmem:[%s1 + $0x10] sm:$0xff]
    %v31 = vld [vmem:[%s1 + $0x18] sm:$0xff]
    %v32 = vld [vmem:[%s0] sm:$0x7]
    %v33 = vld [vmem:[%s2] sm:$0xff]
    %v34 = vld [vmem:[%s2 + $0x8] sm:$0xff]
    %v35 = vld [vmem:[%s2 + $0x10] sm:$0xff]
    %v36 = vld [vmem:[%s2 + $0x18] sm:$0xff]
    %38 = vset.pattern.permute.xlu0 0
    %39 = vperm.xlu0 %38, %v33
    %v40 = vpop.permute.xlu0 %39
    %43 = vset.pattern.permute.xlu0 0
    %44 = vperm.xlu0 %43, %v34
    %v45 = vpop.permute.xlu0 %44
    %48 = vset.pattern.permute.xlu0 0
    %49 = vperm.xlu0 %48, %v35
    %v50 = vpop.permute.xlu0 %49
    %53 = vset.pattern.permute.xlu0 0
    %54 = vperm.xlu0 %53, %v36
    %v55 = vpop.permute.xlu0 %54
    %vm57 = vcmask 23552
    %v59 = vsel %vm57, %v28, 0
    %v62 = vsel %vm57, %v29, 0
    %v65 = vsel %vm57, %v30, 0
    %v68 = vsel %vm57, %v31, 0
    %vm70 = vcmask 1042432
    %v72 = vsel %vm70, %v32, 0
    %74 = vmatprep.subr.mxu0 0.0
    %75 = vmatpush1.msra.mxu0 0.0
    %76 = vmatprep.subr.mxu0 0.0
    %77 = vmatpush1.msra.mxu0 0.0
    %78 = vmatprep.subr.mxu0 0.0
    %79 = vmatpush1.msra.mxu0 0.0
    %80 = vmatprep.subr.mxu0 0.0
    %81 = vmatpush1.msra.mxu0 0.0
    %82 = vmatprep.subr.mxu0 0.0
    %83 = vmatpush1.msra.mxu0 0.0
    %84 = vmatprep.subr.mxu0 0.0
    %85 = vmatpush1.msra.mxu0 0.0
    %86 = vmatprep.subr.mxu0 0.0
    %87 = vmatpush1.msra.mxu0 0.0
    %88 = vmatprep.subr.mxu0 0.0
    %89 = vmatpush1.msra.mxu0 0.0
    %90 = vmatprep.subr.mxu0 0.0
    %91 = vmatpush1.msra.mxu0 0.0
    %92 = vmatprep.subr.mxu0 0.0
    %93 = vmatpush1.msra.mxu0 0.0
    %94 = vmatprep.subr.mxu0 0.0
    %95 = vmatpush1.msra.mxu0 0.0
    %96 = vmatprep.subr.mxu0 0.0
    %97 = vmatpush1.msra.mxu0 0.0
    %98 = vmatprep.subr.mxu0 0.0
    %99 = vmatpush1.msra.mxu0 0.0
    %100 = vmatprep.subr.mxu0 0.0
    %101 = vmatpush1.msra.mxu0 0.0
    %102 = vmatprep.subr.mxu0 0.0
    %103 = vmatpush1.msra.mxu0 0.0
    %104 = vmatprep.subr.mxu0 0.0
    %105 = vmatpush1.msra.mxu0 %v72
    %106 = vmatprep.subr.mxu0 0.0
    %107 = vmatpush2.msra.mxu0 0.0
    %108 = vmatprep.subr.mxu0 0.0
    %109 = vmatpush2.msra.mxu0 0.0
    %110 = vmatprep.subr.mxu0 0.0
    %111 = vmatpush2.msra.mxu0 0.0
    %112 = vmatprep.subr.mxu0 0.0
    %113 = vmatpush2.msra.mxu0 0.0
    %114 = vmatprep.subr.mxu0 0.0
    %115 = vmatpush2.msra.mxu0 0.0
    %116 = vmatprep.subr.mxu0 0.0
    %117 = vmatpush2.msra.mxu0 0.0
    %118 = vmatprep.subr.mxu0 0.0
    %119 = vmatpush2.msra.mxu0 0.0
    %120 = vmatprep.subr.mxu0 0.0
    %121 = vmatpush2.msra.mxu0 0.0
    %122 = vmatprep.subr.mxu0 0.0
    %123 = vmatpush2.msra.mxu0 0.0
    %124 = vmatprep.subr.mxu0 0.0
    %125 = vmatpush2.msra.mxu0 0.0
    %126 = vmatprep.subr.mxu0 0.0
    %127 = vmatpush2.msra.mxu0 0.0
    %128 = vmatprep.subr.mxu0 0.0
    %129 = vmatpush2.msra.mxu0 0.0
    %130 = vmatprep.subr.mxu0 0.0
    %131 = vmatpush2.msra.mxu0 0.0
    %132 = vmatprep.subr.mxu0 0.0
    %133 = vmatpush2.msra.mxu0 0.0
    %134 = vmatprep.subr.mxu0 0.0
    %135 = vmatpush2.msra.mxu0 0.0
    %136 = vmatprep.subr.mxu0 0.0
    %137 = vmatpush2.msra.mxu0 0.0
    %138 = vmatprep.mubr.f32.mxu0 0.0
    %139 = vmatmul.mubr.f32.gmra.mxu0 %v59
    %v140 = vpop.f32.mrf.mxu0
    %v141 = vadd.f32 %v40, %v140
    %v142 = vpop.f32.mrf.mxu0
    %143 = vmatprep.mubr.f32.mxu0 0.0
    %144 = vmatmul.mubr.f32.gmra.mxu0 %v62
    %v145 = vpop.f32.mrf.mxu0
    %v146 = vadd.f32 %v45, %v145
    %v147 = vpop.f32.mrf.mxu0
    %148 = vmatprep.mubr.f32.mxu0 0.0
    %149 = vmatmul.mubr.f32.gmra.mxu0 %v65
    %v150 = vpop.f32.mrf.mxu0
    %v151 = vadd.f32 %v50, %v150
    %v152 = vpop.f32.mrf.mxu0
    %153 = vmatprep.mubr.f32.mxu0 0.0
    %154 = vmatmul.mubr.f32.gmra.mxu0 %v68
    %v155 = vpop.f32.mrf.mxu0
    %v156 = vadd.f32 %v55, %v155
    %v157 = vpop.f32.mrf.mxu0
    %158 = vdwg.mxu0
    %v159 = vtanh.pop %v141
    %v160 = vtanh.pop %v146
    %v161 = vtanh.pop %v151
    %v162 = vtanh.pop %v156
    %v163 = vld [vmem:[%s3] sm:$0xff]
    %v164 = vld [vmem:[%s3 + $0x8] sm:$0xff]
    %v165 = vld [vmem:[%s3 + $0x10] sm:$0xff]
    %v166 = vld [vmem:[%s3 + $0x18] sm:$0xff]
    %v167 = vld [vmem:[%s4] sm:$0xff]
    %v168 = vld [vmem:[%s4 + $0x8] sm:$0xff]
    %v169 = vld [vmem:[%s4 + $0x10] sm:$0xff]
    %v170 = vld [vmem:[%s4 + $0x18] sm:$0xff]
    %172 = vset.pattern.permute.xlu0 0
    %173 = vperm.xlu0 %172, %v167
    %v174 = vpop.permute.xlu0 %173
    %177 = vset.pattern.permute.xlu0 0
    %178 = vperm.xlu0 %177, %v168
    %v179 = vpop.permute.xlu0 %178
    %182 = vset.pattern.permute.xlu0 0
    %183 = vperm.xlu0 %182, %v169
    %v184 = vpop.permute.xlu0 %183
    %187 = vset.pattern.permute.xlu0 0
    %188 = vperm.xlu0 %187, %v170
    %v189 = vpop.permute.xlu0 %188
    %vm191 = vcmask 261120
    %v193 = vsel %vm191, %v163, 0
    %v196 = vsel %vm191, %v164, 0
    %v199 = vsel %vm191, %v165, 0
    %v202 = vsel %vm191, %v166, 0
    %204 = vmatprep.subr.mxu0 0.0
    %205 = vmatpush1.msra.mxu0 0.0
    %206 = vmatprep.subr.mxu0 0.0
    %207 = vmatpush1.msra.mxu0 0.0
    %208 = vmatprep.subr.mxu0 0.0
    %209 = vmatpush1.msra.mxu0 0.0
    %210 = vmatprep.subr.mxu0 0.0
    %211 = vmatpush1.msra.mxu0 0.0
    %212 = vmatprep.subr.mxu0 0.0
    %213 = vmatpush1.msra.mxu0 0.0
    %214 = vmatprep.subr.mxu0 0.0
    %215 = vmatpush1.msra.mxu0 0.0
    %216 = vmatprep.subr.mxu0 0.0
    %217 = vmatpush1.msra.mxu0 0.0
    %218 = vmatprep.subr.mxu0 0.0
    %219 = vmatpush1.msra.mxu0 0.0
    %220 = vmatprep.subr.mxu0 0.0
    %221 = vmatpush1.msra.mxu0 0.0
    %222 = vmatprep.subr.mxu0 0.0
    %223 = vmatpush1.msra.mxu0 0.0
    %224 = vmatprep.subr.mxu0 0.0
    %225 = vmatpush1.msra.mxu0 0.0
    %226 = vmatprep.subr.mxu0 0.0
    %227 = vmatpush1.msra.mxu0 0.0
    %228 = vmatprep.subr.mxu0 0.0
    %229 = vmatpush1.msra.mxu0 %v162
    %230 = vmatprep.subr.mxu0 0.0
    %231 = vmatpush1.msra.mxu0 %v161
    %232 = vmatprep.subr.mxu0 0.0
    %233 = vmatpush1.msra.mxu0 %v160
    %234 = vmatprep.subr.mxu0 0.0
    %235 = vmatpush1.msra.mxu0 %v159
    %236 = vmatprep.subr.mxu0 0.0
    %237 = vmatpush2.msra.mxu0 0.0
    %238 = vmatprep.subr.mxu0 0.0
    %239 = vmatpush2.msra.mxu0 0.0
    %240 = vmatprep.subr.mxu0 0.0
    %241 = vmatpush2.msra.mxu0 0.0
    %242 = vmatprep.subr.mxu0 0.0
    %243 = vmatpush2.msra.mxu0 0.0
    %244 = vmatprep.subr.mxu0 0.0
    %245 = vmatpush2.msra.mxu0 0.0
    %246 = vmatprep.subr.mxu0 0.0
    %247 = vmatpush2.msra.mxu0 0.0
    %248 = vmatprep.subr.mxu0 0.0
    %249 = vmatpush2.msra.mxu0 0.0
    %250 = vmatprep.subr.mxu0 0.0
    %251 = vmatpush2.msra.mxu0 0.0
    %252 = vmatprep.subr.mxu0 0.0
    %253 = vmatpush2.msra.mxu0 0.0
    %254 = vmatprep.subr.mxu0 0.0
    %255 = vmatpush2.msra.mxu0 0.0
    %256 = vmatprep.subr.mxu0 0.0
    %257 = vmatpush2.msra.mxu0 0.0
    %258 = vmatprep.subr.mxu0 0.0
    %259 = vmatpush2.msra.mxu0 0.0
    %260 = vmatprep.subr.mxu0 0.0
    %261 = vmatpush2.msra.mxu0 0.0
    %262 = vmatprep.subr.mxu0 0.0
    %263 = vmatpush2.msra.mxu0 0.0
    %264 = vmatprep.subr.mxu0 0.0
    %265 = vmatpush2.msra.mxu0 0.0
    %266 = vmatprep.subr.mxu0 0.0
    %267 = vmatpush2.msra.mxu0 0.0
    %268 = vmatprep.mubr.f32.mxu0 0.0
    %269 = vmatmul.mubr.f32.gmra.mxu0 %v193
    %v270 = vpop.f32.mrf.mxu0
    %v271 = vadd.f32 %v174, %v270
    %v272 = vpop.f32.mrf.mxu0
    %273 = vmatprep.mubr.f32.mxu0 0.0
    %274 = vmatmul.mubr.f32.gmra.mxu0 %v196
    %v275 = vpop.f32.mrf.mxu0
    %v276 = vadd.f32 %v179, %v275
    %v277 = vpop.f32.mrf.mxu0
    %278 = vmatprep.mubr.f32.mxu0 0.0
    %279 = vmatmul.mubr.f32.gmra.mxu0 %v199
    %v280 = vpop.f32.mrf.mxu0
    %v281 = vadd.f32 %v184, %v280
    %v282 = vpop.f32.mrf.mxu0
    %283 = vmatprep.mubr.f32.mxu0 0.0
    %284 = vmatmul.mubr.f32.gmra.mxu0 %v202
    %v285 = vpop.f32.mrf.mxu0
    %v286 = vadd.f32 %v189, %v285
    %v287 = vpop.f32.mrf.mxu0
    %288 = vdwg.mxu0
    %v289 = vtanh.pop %v271
    %v290 = vtanh.pop %v276
    %v291 = vtanh.pop %v281
    %v292 = vtanh.pop %v286
    %s293 = scalar_lea.vmem %s3, 32
    %v294 = vld [vmem:[%s293] sm:$0xff]
    %v295 = vld [vmem:[%s293 + $0x8] sm:$0xff]
    %v296 = vld [vmem:[%s293 + $0x10] sm:$0xff]
    %v297 = vld [vmem:[%s293 + $0x18] sm:$0xff]
    %s298 = scalar_lea.vmem %s4, 32
    %v299 = vld [vmem:[%s298] sm:$0xff]
    %v300 = vld [vmem:[%s298 + $0x8] sm:$0xff]
    %v301 = vld [vmem:[%s298 + $0x10] sm:$0xff]
    %v302 = vld [vmem:[%s298 + $0x18] sm:$0xff]
    %304 = vset.pattern.permute.xlu0 0
    %305 = vperm.xlu0 %304, %v299
    %v306 = vpop.permute.xlu0 %305
    %309 = vset.pattern.permute.xlu0 0
    %310 = vperm.xlu0 %309, %v300
    %v311 = vpop.permute.xlu0 %310
    %314 = vset.pattern.permute.xlu0 0
    %315 = vperm.xlu0 %314, %v301
    %v316 = vpop.permute.xlu0 %315
    %319 = vset.pattern.permute.xlu0 0
    %320 = vperm.xlu0 %319, %v302
    %v321 = vpop.permute.xlu0 %320
    %v324 = vsel %vm191, %v294, 0
    %v327 = vsel %vm191, %v295, 0
    %v330 = vsel %vm191, %v296, 0
    %v333 = vsel %vm191, %v297, 0
    %335 = vmatprep.subr.mxu0 0.0
    %336 = vmatpush1.msra.mxu0 0.0
    %337 = vmatprep.subr.mxu0 0.0
    %338 = vmatpush1.msra.mxu0 0.0
    %339 = vmatprep.subr.mxu0 0.0
    %340 = vmatpush1.msra.mxu0 0.0
    %341 = vmatprep.subr.mxu0 0.0
    %342 = vmatpush1.msra.mxu0 0.0
    %343 = vmatprep.subr.mxu0 0.0
    %344 = vmatpush1.msra.mxu0 0.0
    %345 = vmatprep.subr.mxu0 0.0
    %346 = vmatpush1.msra.mxu0 0.0
    %347 = vmatprep.subr.mxu0 0.0
    %348 = vmatpush1.msra.mxu0 0.0
    %349 = vmatprep.subr.mxu0 0.0
    %350 = vmatpush1.msra.mxu0 0.0
    %351 = vmatprep.subr.mxu0 0.0
    %352 = vmatpush1.msra.mxu0 0.0
    %353 = vmatprep.subr.mxu0 0.0
    %354 = vmatpush1.msra.mxu0 0.0
    %355 = vmatprep.subr.mxu0 0.0
    %356 = vmatpush1.msra.mxu0 0.0
    %357 = vmatprep.subr.mxu0 0.0
    %358 = vmatpush1.msra.mxu0 0.0
    %359 = vmatprep.subr.mxu0 0.0
    %360 = vmatpush1.msra.mxu0 %v292
    %361 = vmatprep.subr.mxu0 0.0
    %362 = vmatpush1.msra.mxu0 %v291
    %363 = vmatprep.subr.mxu0 0.0
    %364 = vmatpush1.msra.mxu0 %v290
    %365 = vmatprep.subr.mxu0 0.0
    %366 = vmatpush1.msra.mxu0 %v289
    %367 = vmatprep.subr.mxu0 0.0
    %368 = vmatpush2.msra.mxu0 0.0
    %369 = vmatprep.subr.mxu0 0.0
    %370 = vmatpush2.msra.mxu0 0.0
    %371 = vmatprep.subr.mxu0 0.0
    %372 = vmatpush2.msra.mxu0 0.0
    %373 = vmatprep.subr.mxu0 0.0
    %374 = vmatpush2.msra.mxu0 0.0
    %375 = vmatprep.subr.mxu0 0.0
    %376 = vmatpush2.msra.mxu0 0.0
    %377 = vmatprep.subr.mxu0 0.0
    %378 = vmatpush2.msra.mxu0 0.0
    %379 = vmatprep.subr.mxu0 0.0
    %380 = vmatpush2.msra.mxu0 0.0
    %381 = vmatprep.subr.mxu0 0.0
    %382 = vmatpush2.msra.mxu0 0.0
    %383 = vmatprep.subr.mxu0 0.0
    %384 = vmatpush2.msra.mxu0 0.0
    %385 = vmatprep.subr.mxu0 0.0
    %386 = vmatpush2.msra.mxu0 0.0
    %387 = vmatprep.subr.mxu0 0.0
    %388 = vmatpush2.msra.mxu0 0.0
    %389 = vmatprep.subr.mxu0 0.0
    %390 = vmatpush2.msra.mxu0 0.0
    %391 = vmatprep.subr.mxu0 0.0
    %392 = vmatpush2.msra.mxu0 0.0
    %393 = vmatprep.subr.mxu0 0.0
    %394 = vmatpush2.msra.mxu0 0.0
    %395 = vmatprep.subr.mxu0 0.0
    %396 = vmatpush2.msra.mxu0 0.0
    %397 = vmatprep.subr.mxu0 0.0
    %398 = vmatpush2.msra.mxu0 0.0
    %399 = vmatprep.mubr.f32.mxu0 0.0
    %400 = vmatmul.mubr.f32.gmra.mxu0 %v324
    %v401 = vpop.f32.mrf.mxu0
    %v402 = vadd.f32 %v306, %v401
    %v403 = vpop.f32.mrf.mxu0
    %404 = vmatprep.mubr.f32.mxu0 0.0
    %405 = vmatmul.mubr.f32.gmra.mxu0 %v327
    %v406 = vpop.f32.mrf.mxu0
    %v407 = vadd.f32 %v311, %v406
    %v408 = vpop.f32.mrf.mxu0
    %409 = vmatprep.mubr.f32.mxu0 0.0
    %410 = vmatmul.mubr.f32.gmra.mxu0 %v330
    %v411 = vpop.f32.mrf.mxu0
    %v412 = vadd.f32 %v316, %v411
    %v413 = vpop.f32.mrf.mxu0
    %414 = vmatprep.mubr.f32.mxu0 0.0
    %415 = vmatmul.mubr.f32.gmra.mxu0 %v333
    %v416 = vpop.f32.mrf.mxu0
    %v417 = vadd.f32 %v321, %v416
    %v418 = vpop.f32.mrf.mxu0
    %419 = vdwg.mxu0
    %v420 = vtanh.pop %v402
    %v421 = vtanh.pop %v407
    %v422 = vtanh.pop %v412
    %v423 = vtanh.pop %v417
    %v424 = vld [vmem:[%s5] sm:$0xff]
    %v425 = vld [vmem:[%s5 + $0x8] sm:$0xff]
    %v426 = vld [vmem:[%s5 + $0x10] sm:$0xff]
    %v427 = vld [vmem:[%s5 + $0x18] sm:$0xff]
    %429 = vset.pattern.permute.xlu0 0
    %430 = vperm.xlu0 %429, %v424
    %v431 = vpop.permute.xlu0 %430
    %434 = vset.pattern.permute.xlu0 0
    %435 = vperm.xlu0 %434, %v425
    %v436 = vpop.permute.xlu0 %435
    %439 = vset.pattern.permute.xlu0 0
    %440 = vperm.xlu0 %439, %v426
    %v441 = vpop.permute.xlu0 %440
    %444 = vset.pattern.permute.xlu0 0
    %445 = vperm.xlu0 %444, %v427
    %v446 = vpop.permute.xlu0 %445
    %v448 = vmul.f32 %v420, %v431
    %v449 = vmul.f32 %v421, %v436
    %v450 = vmul.f32 %v422, %v441
    %v451 = vmul.f32 %v423, %v446
    %v452 = vadd.f32 %v448, %v449
    %v453 = vadd.f32 %v452, %v450
    %v454 = vadd.f32 %v453, %v451
    %v455 = vrot.slane %v454, 4
    %v456 = vadd.f32 %v454, %v455
    %v457 = vrot.slane %v456, 2
    %v458 = vadd.f32 %v456, %v457
    %v459 = vrot.slane %v458, 1
    %v460 = vadd.f32 %v458, %v459
    %s461 = sld [smem:[#allocation2]]
    %v462 = vstv %s461
    %v463 = vadd.f32 %v460, %v462
    %464 = vst [vmem:[#allocation3] sm:$0x1] %v463
    // Predicated region
    $region30: #{tpu_custom_call.1} parent=1 // pred_check
      _
    $region31: #{tpu_custom_call.1} parent=1 // pred_check_branch
      %466 = sbr.rel (0) target = $region33
    $region32: #{tpu_custom_call.1} parent=1 // pred_region
      %s468 = ssub.s32 16, 16
      %469 = vsyncadd [#allocation4], %s468
      %s471 = sshll.u32 [#allocation3], 4
      %s472 = int_to_ptr.vmem [resolvable:$true] %s471
      %474 = dma.vmem_to_hbm [thread:$0]  %s472, 16, %s7, [#allocation4]
    $region33: #{tpu_custom_call.1} parent=1 // pred_fallthru
      _
    // Predicated region
    $region34: #{tpu_custom_call.1} parent=1 // pred_check
      _
    $region35: #{tpu_custom_call.1} parent=1 // pred_check_branch
      %476 = sbr.rel (0) target = $region37
    $region36: #{tpu_custom_call.1} parent=1 // pred_region
      %477 = dma.done [#allocation4], 16
    $region37: #{tpu_custom_call.1} parent=1 // pred_fallthru
      _
    %478 = vsyncpa [#allocation4], 1

</llo_original>
